<compile_context>
chip_gen: v7x
topology: tpu7x:2x2x1
jax: 0.10.0
libtpu: 0.0.40
codegen_flags: <defaults>
</compile_context>

<pallas_src>
import jax
import jax.numpy as jnp
from jax.experimental import pallas as pl
from jax.experimental.pallas import tpu as pltpu


# ---------------------------------------------------------------------------
# In-kernel atan2 built only from arithmetic + select (guaranteed Mosaic
# lowering; polynomial from Abramowitz & Stegun 4.4.49, |err| <= 2e-8 on [0,1]).
# The divide is replaced by an EUP approx reciprocal (~2^-12 rel error, far
# below the phase tolerance).
# ---------------------------------------------------------------------------
def _poly_atan(z):
    s = z * z
    p = jnp.float32(0.0028662257)
    for c in (-0.0161657367, 0.0429096138, -0.0752896400, 0.1065626393,
              -0.1420889944, 0.1999355085, -0.3333314528):
        p = p * s + jnp.float32(c)
    return z + z * s * p


def _atan2(y, x):
    ax = jnp.abs(x)
    ay = jnp.abs(y)
    hi = jnp.maximum(ax, ay)
    lo = jnp.minimum(ax, ay)
    denom = jnp.where(hi == 0.0, jnp.float32(1.0), hi)
    r = _poly_atan(lo * pl.reciprocal(denom, approx=True))
    r = jnp.where(ay > ax, jnp.float32(jnp.pi / 2) - r, r)
    r = jnp.where(x < 0.0, jnp.float32(jnp.pi) - r, r)
    r = jnp.where(y < 0.0, -r, r)
    return jnp.where(hi == 0.0, jnp.zeros_like(r), r)


# ---------------------------------------------------------------------------
# Kernel: one tile of frames -> fused windowed real-DFT (single MXU matmul
# producing [real | imag] side by side) -> magnitude & phase, lane-dense stores.
# ---------------------------------------------------------------------------
def _decouple_kernel(frames_ref, w_ref, mag_ref, spec_ref):
    f_pad = mag_ref.shape[-1]
    ri = jnp.dot(frames_ref[...], w_ref[...],
                 preferred_element_type=jnp.float32)      # (tm, 2*F_pad)
    real = ri[:, :f_pad]                                  # lane-tile aligned slices
    imag = ri[:, f_pad:]
    power = jnp.maximum(real * real + imag * imag, jnp.float32(1e-7))
    mag_ref[...] = jnp.sqrt(power)
    spec_ref[...] = _atan2(imag, real)


def _round_up(a, b):
    return (a + b - 1) // b * b


def decouple(x, fft_size=64, shift_size=16, win_length=48):
    """JAX/Pallas equivalent of Decouple.forward for input x of shape (B, T)."""
    x = x.astype(jnp.float32)
    B, T = x.shape
    n_fft, hop = fft_size, shift_size
    pad = n_fft // 2

    # --- glue: center reflect-pad + frame extraction (torch.stft center=True) ---
    x_pad = jnp.pad(x, ((0, 0), (pad, pad)), mode="reflect")
    n_frames = 1 + (x_pad.shape[1] - n_fft) // hop
    idx = jnp.arange(n_frames)[:, None] * hop + jnp.arange(n_fft)[None, :]
    frames = x_pad[:, idx]                                   # (B, n_frames, n_fft)
    R = B * n_frames
    frames = frames.reshape(R, n_fft)

    # --- glue: periodic Hann window (torch.hann_window default), centered in n_fft
    n = jnp.arange(win_length, dtype=jnp.float32)
    win = 0.5 - 0.5 * jnp.cos(2.0 * jnp.pi * n / win_length)
    lpad = (n_fft - win_length) // 2
    win_full = jnp.zeros((n_fft,), jnp.float32).at[lpad:lpad + win_length].set(win)

    # --- glue: fused, windowed real-DFT weight matrix, lane-padded --------------
    # W[:, :F]           = win * cos(2*pi*n*k/n_fft)         -> real part
    # W[:, F_pad:F_pad+F] = -win * sin(2*pi*n*k/n_fft)        -> imag part
    F = n_fft // 2 + 1
    F_pad = _round_up(F, 128)
    k = jnp.arange(F, dtype=jnp.float32)
    nn_ = jnp.arange(n_fft, dtype=jnp.float32)
    ang = 2.0 * jnp.pi * nn_[:, None] * k[None, :] / n_fft
    cos_w = jnp.cos(ang) * win_full[:, None]                 # (n_fft, F)
    sin_w = -jnp.sin(ang) * win_full[:, None]                # (n_fft, F)
    W = jnp.zeros((n_fft, 2 * F_pad), jnp.float32)
    W = W.at[:, :F].set(cos_w).at[:, F_pad:F_pad + F].set(sin_w)

    # --- tile rows; large sublane-aligned tile to amortize grid-step overhead ---
    tm = min(512, _round_up(R, 8))
    R_pad = _round_up(R, tm)
    frames_p = jnp.pad(frames, ((0, R_pad - R), (0, 0)))

    mag_p, spec_p = pl.pallas_call(
        _decouple_kernel,
        out_shape=(jax.ShapeDtypeStruct((R_pad, F_pad), jnp.float32),
                   jax.ShapeDtypeStruct((R_pad, F_pad), jnp.float32)),
        grid_spec=pltpu.PrefetchScalarGridSpec(
            num_scalar_prefetch=0,
            grid=(R_pad // tm,),
            in_specs=[
                pl.BlockSpec((tm, n_fft), lambda i: (i, 0)),       # frames tile
                pl.BlockSpec((n_fft, 2 * F_pad), lambda i: (0, 0)),  # fused DFT weights
            ],
            out_specs=[
                pl.BlockSpec((tm, F_pad), lambda i: (i, 0)),
                pl.BlockSpec((tm, F_pad), lambda i: (i, 0)),
            ],
        ),
        compiler_params=pltpu.CompilerParams(
            dimension_semantics=("parallel",),
            vmem_limit_bytes=64 * 1024 * 1024),
    )(frames_p, W)

    # padded rows / padded frequency lanes carry clamp-floor garbage -> slice off
    mag = mag_p[:R, :F].reshape(B, n_frames, F)                        # torch: (B, N, F)
    spec = spec_p[:R, :F].reshape(B, n_frames, F).transpose(0, 2, 1)   # torch: (B, F, N)
    return mag, spec


if __name__ == "__main__":
    key = jax.random.PRNGKey(0)
    B, T = 2, 256
    fft_size, shift_size, win_length = 64, 16, 48   # scaled-down (1024/120/600)
    x = jax.random.normal(key, (B, T), dtype=jnp.float32)

    mag, spec = decouple(x, fft_size, shift_size, win_length)
    jax.block_until_ready((mag, spec))

    # --- plain-JAX reference (rfft) for a sanity check ---
    pad = fft_size // 2
    x_pad = jnp.pad(x, ((0, 0), (pad, pad)), mode="reflect")
    n_frames = 1 + (x_pad.shape[1] - fft_size) // shift_size
    idx = jnp.arange(n_frames)[:, None] * shift_size + jnp.arange(fft_size)[None, :]
    frames = x_pad[:, idx]
    n = jnp.arange(win_length, dtype=jnp.float32)
    win = 0.5 - 0.5 * jnp.cos(2.0 * jnp.pi * n / win_length)
    lpad = (fft_size - win_length) // 2
    wfull = jnp.zeros((fft_size,), jnp.float32).at[lpad:lpad + win_length].set(win)
    stft_c = jnp.fft.rfft(frames * wfull, axis=-1)                 # (B, N, F)
    mag_ref = jnp.sqrt(jnp.maximum(stft_c.real ** 2 + stft_c.imag ** 2, 1e-7))
    spec_ref = jnp.arctan2(stft_c.imag, stft_c.real).transpose(0, 2, 1)

    assert mag.shape == (B, n_frames, fft_size // 2 + 1)
    assert spec.shape == (B, fft_size // 2 + 1, n_frames)
    assert jnp.allclose(mag, mag_ref, rtol=1e-3, atol=1e-3)

    # phase check modulo 2*pi, only where magnitude is well-conditioned
    dphi = (spec - spec_ref + jnp.pi) % (2.0 * jnp.pi) - jnp.pi
    mask = mag.transpose(0, 2, 1) > 1e-1
    assert jnp.max(jnp.where(mask, jnp.abs(dphi), 0.0)) < 2e-2

    print("KERNEL_OK")
</pallas_src>

<mosaic_0001>
module attributes {stable_mosaic.version = 11 : i64} {
  func.func @_decouple_kernel(%arg0: i32, %arg1: memref<40x64xf32, #tpu.memory_space<vmem>>, %arg2: memref<64x256xf32, #tpu.memory_space<vmem>>, %arg3: memref<40x128xf32, #tpu.memory_space<vmem>>, %arg4: memref<40x128xf32, #tpu.memory_space<vmem>>) attributes {dimension_semantics = [#tpu.dimension_semantics<parallel>], iteration_bounds = array<i64: 1>, scalar_prefetch = 0 : i64, scratch_operands = 0 : i64, tpu.core_type = #tpu.core_type<tc>, window_params = [{transform_indices = @transform_0, window_bounds = array<i64: 40, 64>}, {pipeline_mode = #tpu.pipeline_mode<synchronous>, transform_indices = @transform_1, window_bounds = array<i64: 64, 256>}, {transform_indices = @transform_2, window_bounds = array<i64: 40, 128>}, {transform_indices = @transform_3, window_bounds = array<i64: 40, 128>}]} {
    %c0 = arith.constant 0 : index
    %c0_0 = arith.constant 0 : index
    %0 = vector.load %arg1[%c0, %c0_0] : memref<40x64xf32, #tpu.memory_space<vmem>>, vector<40x64xf32>
    %c0_1 = arith.constant 0 : index
    %c0_2 = arith.constant 0 : index
    %1 = vector.load %arg2[%c0_1, %c0_2] : memref<64x256xf32, #tpu.memory_space<vmem>>, vector<64x256xf32>
    %cst = arith.constant dense<0.000000e+00> : vector<40x256xf32>
    %2 = tpu.matmul %0, %1, %cst {dimension_numbers = #tpu.dot_dimension_numbers<[1], [0], [0], [1], [0, 0, 1, 1], [], []>} : vector<40x64xf32>, vector<64x256xf32>, vector<40x256xf32> -> vector<40x256xf32>
    %3 = vector.extract_strided_slice %2 {offsets = [0, 0], sizes = [40, 128], strides = [1, 1]} : vector<40x256xf32> to vector<40x128xf32>
    %4 = vector.extract_strided_slice %2 {offsets = [0, 128], sizes = [40, 128], strides = [1, 1]} : vector<40x256xf32> to vector<40x128xf32>
    %5 = arith.mulf %3, %3 : vector<40x128xf32>
    %6 = arith.mulf %4, %4 : vector<40x128xf32>
    %7 = arith.addf %5, %6 : vector<40x128xf32>
    %cst_3 = arith.constant 1.000000e-07 : f32
    %8 = vector.broadcast %cst_3 : f32 to vector<40x128xf32>
    %9 = arith.maximumf %7, %8 : vector<40x128xf32>
    %10 = math.sqrt %9 : vector<40x128xf32>
    %c0_4 = arith.constant 0 : index
    %c0_5 = arith.constant 0 : index
    %11 = vector.load %arg3[%c0_4, %c0_5] : memref<40x128xf32, #tpu.memory_space<vmem>>, vector<40x128xf32>
    tpu.vector_store %arg3[%c0_4, %c0_5], %10 {strides = array<i32>} : memref<40x128xf32, #tpu.memory_space<vmem>>, vector<40x128xf32>,
    %12 = math.absf %3 : vector<40x128xf32>
    %13 = math.absf %4 : vector<40x128xf32>
    %14 = arith.maximumf %12, %13 : vector<40x128xf32>
    %15 = arith.minimumf %12, %13 : vector<40x128xf32>
    %cst_6 = arith.constant 0.000000e+00 : f32
    %16 = vector.broadcast %cst_6 : f32 to vector<40x128xf32>
    %17 = arith.cmpf oeq, %14, %16 : vector<40x128xf32>
    %cst_7 = arith.constant 1.000000e+00 : f32
    %18 = vector.broadcast %cst_7 : f32 to vector<40x128xf32>
    %19 = arith.select %17, %18, %14 : vector<40x128xi1>, vector<40x128xf32>
    %20 = tpu.reciprocal %19 {approx = true} : vector<40x128xf32> -> vector<40x128xf32>
    %21 = arith.mulf %15, %20 : vector<40x128xf32>
    %22 = arith.mulf %21, %21 : vector<40x128xf32>
    %cst_8 = arith.constant 0.00286622578 : f32
    %23 = vector.broadcast %cst_8 : f32 to vector<40x128xf32>
    %24 = arith.mulf %23, %22 : vector<40x128xf32>
    %cst_9 = arith.constant -0.0161657371 : f32
    %25 = vector.broadcast %cst_9 : f32 to vector<40x128xf32>
    %26 = arith.addf %24, %25 : vector<40x128xf32>
    %27 = arith.mulf %26, %22 : vector<40x128xf32>
    %cst_10 = arith.constant 0.0429096147 : f32
    %28 = vector.broadcast %cst_10 : f32 to vector<40x128xf32>
    %29 = arith.addf %27, %28 : vector<40x128xf32>
    %30 = arith.mulf %29, %22 : vector<40x128xf32>
    %cst_11 = arith.constant -0.0752896368 : f32
    %31 = vector.broadcast %cst_11 : f32 to vector<40x128xf32>
    %32 = arith.addf %30, %31 : vector<40x128xf32>
    %33 = arith.mulf %32, %22 : vector<40x128xf32>
    %cst_12 = arith.constant 0.106562637 : f32
    %34 = vector.broadcast %cst_12 : f32 to vector<40x128xf32>
    %35 = arith.addf %33, %34 : vector<40x128xf32>
    %36 = arith.mulf %35, %22 : vector<40x128xf32>
    %cst_13 = arith.constant -1.420890e-01 : f32
    %37 = vector.broadcast %cst_13 : f32 to vector<40x128xf32>
    %38 = arith.addf %36, %37 : vector<40x128xf32>
    %39 = arith.mulf %38, %22 : vector<40x128xf32>
    %cst_14 = arith.constant 0.199935511 : f32
    %40 = vector.broadcast %cst_14 : f32 to vector<40x128xf32>
    %41 = arith.addf %39, %40 : vector<40x128xf32>
    %42 = arith.mulf %41, %22 : vector<40x128xf32>
    %cst_15 = arith.constant -0.333331466 : f32
    %43 = vector.broadcast %cst_15 : f32 to vector<40x128xf32>
    %44 = arith.addf %42, %43 : vector<40x128xf32>
    %45 = arith.mulf %21, %22 : vector<40x128xf32>
    %46 = arith.mulf %45, %44 : vector<40x128xf32>
    %47 = arith.addf %21, %46 : vector<40x128xf32>
    %48 = arith.cmpf ogt, %13, %12 : vector<40x128xf32>
    %cst_16 = arith.constant 1.57079637 : f32
    %49 = vector.broadcast %cst_16 : f32 to vector<40x128xf32>
    %50 = arith.subf %49, %47 : vector<40x128xf32>
    %51 = arith.select %48, %50, %47 : vector<40x128xi1>, vector<40x128xf32>
    %cst_17 = arith.constant 0.000000e+00 : f32
    %52 = vector.broadcast %cst_17 : f32 to vector<40x128xf32>
    %53 = arith.cmpf olt, %3, %52 : vector<40x128xf32>
    %cst_18 = arith.constant 3.14159274 : f32
    %54 = vector.broadcast %cst_18 : f32 to vector<40x128xf32>
    %55 = arith.subf %54, %51 : vector<40x128xf32>
    %56 = arith.select %53, %55, %51 : vector<40x128xi1>, vector<40x128xf32>
    %cst_19 = arith.constant 0.000000e+00 : f32
    %57 = vector.broadcast %cst_19 : f32 to vector<40x128xf32>
    %58 = arith.cmpf olt, %4, %57 : vector<40x128xf32>
    %cst_20 = arith.constant 0.000000e+00 : f32
    %59 = vector.broadcast %cst_20 : f32 to vector<40x128xf32>
    %60 = arith.subf %59, %56 : vector<40x128xf32>
    %61 = arith.select %58, %60, %56 : vector<40x128xi1>, vector<40x128xf32>
    %cst_21 = arith.constant 0.000000e+00 : f32
    %62 = vector.broadcast %cst_21 : f32 to vector<40x128xf32>
    %63 = arith.cmpf oeq, %14, %62 : vector<40x128xf32>
    %cst_22 = arith.constant 0.000000e+00 : f32
    %64 = vector.broadcast %cst_22 : f32 to vector<40x128xf32>
    %65 = arith.select %63, %64, %61 : vector<40x128xi1>, vector<40x128xf32>
    %c0_23 = arith.constant 0 : index
    %c0_24 = arith.constant 0 : index
    %66 = vector.load %arg4[%c0_23, %c0_24] : memref<40x128xf32, #tpu.memory_space<vmem>>, vector<40x128xf32>
    tpu.vector_store %arg4[%c0_23, %c0_24], %65 {strides = array<i32>} : memref<40x128xf32, #tpu.memory_space<vmem>>, vector<40x128xf32>,
    return
  }
  func.func @transform_0(%arg0: i32) -> (i32, i32) {
    %c0_i32 = arith.constant 0 : i32
    %c0_i32_0 = arith.constant 0 : i32
    return %arg0, %c0_i32 : i32, i32
  }
  func.func @transform_1(%arg0: i32) -> (i32, i32) {
    %c0_i32 = arith.constant 0 : i32
    %c0_i32_0 = arith.constant 0 : i32
    %c0_i32_1 = arith.constant 0 : i32
    return %c0_i32, %c0_i32_0 : i32, i32
  }
  func.func @transform_2(%arg0: i32) -> (i32, i32) {
    %c0_i32 = arith.constant 0 : i32
    %c0_i32_0 = arith.constant 0 : i32
    return %arg0, %c0_i32 : i32, i32
  }
  func.func @transform_3(%arg0: i32) -> (i32, i32) {
    %c0_i32 = arith.constant 0 : i32
    %c0_i32_0 = arith.constant 0 : i32
    return %arg0, %c0_i32 : i32, i32
  }
}

</mosaic_0001>

<llo_original>
// kernel: tpu_custom_call.1
$region0: #{tpu_custom_call.1}
  #allocation0 [shape = 'u32[]', space=smem, size = 0x4, offset = 0x4, fixed_abs, tag = 'smem constant byte address 0x4 - core index']
  #allocation1 [shape = 'u32[144,128]{1,0:T(1,128)}', space=vmem, size = 0x12000, scoped, tag = 'internal scratch']
  %s0 = inlined_call_operand.hbm [shape: f32[40,64], index: 0, kind: input, shape index: {}]
  %s1 = inlined_call_operand.hbm [shape: f32[64,256], index: 1, kind: input, shape index: {}]
  %s2 = inlined_call_operand.hbm [shape: f32[40,128], index: 2, kind: output, shape index: {0}]
  %s3 = inlined_call_operand.hbm [shape: f32[40,128], index: 3, kind: output, shape index: {1}]
  %4 = xla_tuple %s2, %s3
  %s5 = sld [smem:[#allocation0]]
  $region34: #{tpu_custom_call.1} parent=0
    _
  %s7 = ssub.s32 1, %s5
  %s8 = scalar_select 0, %s7, %s5
  $region1: #{tpu_custom_call.1} parent=0
    #allocation2 [shape = 'u8[20480]{0}', space=vmem, size = 0x5000, scoped, tag = 'input window, operand 0, single buffered']
    #allocation3 [shape = 's32[1]{0}', space=sflag, size = 0x4, scoped, tag = 'scoped memory for tpu_custom_call.1']
    #allocation4 [shape = 's32[1]{0}', space=sflag, size = 0x4, scoped, tag = 'scoped memory for tpu_custom_call.1']
    #allocation5 [shape = 'u8[65536]{0}', space=vmem, size = 0x10000, scoped, tag = 'input window, operand 1, single buffered']
    #allocation6 [shape = 's32[1]{0}', space=sflag, size = 0x4, scoped, tag = 'scoped memory for tpu_custom_call.1']
    #allocation7 [shape = 'u8[20480]{0}', space=vmem, size = 0x5000, scoped, tag = 'output window, operand 0, single buffered']
    #allocation8 [shape = 'u8[20480]{0}', space=vmem, size = 0x5000, scoped, tag = 'output window, operand 1, single buffered']
    #allocation9 [shape = 's32[1]{0}', space=sflag, size = 0x4, scoped, tag = 'scoped memory for tpu_custom_call.1']
    %9 = vsyncpa [#allocation3], 0
    %10 = vsyncpa [#allocation6], 0
    %11 = vsyncpa [#allocation4], 0
    %12 = vsyncpa [#allocation9], 0
    // Predicated region
    $region2: #{tpu_custom_call.1} parent=1 // pred_check
      _
    $region3: #{tpu_custom_call.1} parent=1 // pred_check_branch
      %14 = sbr.rel (0) target = $region5
    $region4: #{tpu_custom_call.1} parent=1 // pred_region
      %s16 = ssub.s32 640, 640
      %17 = vsyncadd [#allocation3], %s16
      %s18 = sshll.u32 [#allocation2], 4
      %s19 = int_to_ptr.vmem [resolvable:$true] %s18
      %24 = dma.hbm_to_vmem [thread:$0]  %s0, 640, %s19, [#allocation3], 128, 128, 8
    $region5: #{tpu_custom_call.1} parent=1 // pred_fallthru
      _
    // Predicated region
    $region6: #{tpu_custom_call.1} parent=1 // pred_check
      _
    $region7: #{tpu_custom_call.1} parent=1 // pred_check_branch
      %26 = sbr.rel (0) target = $region9
    $region8: #{tpu_custom_call.1} parent=1 // pred_region
      %s28 = ssub.s32 2048, 2048
      %29 = vsyncadd [#allocation6], %s28
      %s30 = sshll.u32 [#allocation5], 4
      %s31 = int_to_ptr.vmem [resolvable:$true] %s30
      %36 = dma.hbm_to_vmem [thread:$0]  %s1, 2048, %s31, [#allocation6], 256, 256, 16
    $region9: #{tpu_custom_call.1} parent=1 // pred_fallthru
      _
    // Predicated region
    $region10: #{tpu_custom_call.1} parent=1 // pred_check
      _
    $region11: #{tpu_custom_call.1} parent=1 // pred_check_branch
      %38 = sbr.rel (0) target = $region13
    $region12: #{tpu_custom_call.1} parent=1 // pred_region
      %39 = dma.done [#allocation3], 640
    $region13: #{tpu_custom_call.1} parent=1 // pred_fallthru
      _
    // Predicated region
    $region14: #{tpu_custom_call.1} parent=1 // pred_check
      _
    $region15: #{tpu_custom_call.1} parent=1 // pred_check_branch
      %41 = sbr.rel (0) target = $region17
    $region16: #{tpu_custom_call.1} parent=1 // pred_region
      %42 = dma.done [#allocation6], 2048
    $region17: #{tpu_custom_call.1} parent=1 // pred_fallthru
      _
    %v43 = vld [vmem:[#allocation2] sm:$0xff]
    %v44 = vld [vmem:[#allocation2 + $0x8] sm:$0xff]
    %v45 = vld [vmem:[#allocation2 + $0x10] sm:$0xff]
    %v46 = vld [vmem:[#allocation2 + $0x18] sm:$0xff]
    %v47 = vld [vmem:[#allocation2 + $0x20] sm:$0xff]
    %v48 = vld [vmem:[#allocation5] sm:$0xff]
    %v49 = vld [vmem:[#allocation5 + $0x8] sm:$0xff]
    %v50 = vld [vmem:[#allocation5 + $0x10] sm:$0xff]
    %v51 = vld [vmem:[#allocation5 + $0x18] sm:$0xff]
    %v52 = vld [vmem:[#allocation5 + $0x20] sm:$0xff]
    %v53 = vld [vmem:[#allocation5 + $0x28] sm:$0xff]
    %v54 = vld [vmem:[#allocation5 + $0x30] sm:$0xff]
    %v55 = vld [vmem:[#allocation5 + $0x38] sm:$0xff]
    %v56 = vld [vmem:[#allocation5 + $0x40] sm:$0xff]
    %v57 = vld [vmem:[#allocation5 + $0x48] sm:$0xff]
    %v58 = vld [vmem:[#allocation5 + $0x50] sm:$0xff]
    %v59 = vld [vmem:[#allocation5 + $0x58] sm:$0xff]
    %v60 = vld [vmem:[#allocation5 + $0x60] sm:$0xff]
    %v61 = vld [vmem:[#allocation5 + $0x68] sm:$0xff]
    %v62 = vld [vmem:[#allocation5 + $0x70] sm:$0xff]
    %v63 = vld [vmem:[#allocation5 + $0x78] sm:$0xff]
    %vm64 = vcmask 523264
    %v66 = vsel %vm64, %v43, 0
    %v69 = vsel %vm64, %v44, 0
    %v72 = vsel %vm64, %v45, 0
    %v75 = vsel %vm64, %v46, 0
    %v78 = vsel %vm64, %v47, 0
    %80 = vmatprep.subr.mxu0 %v49
    %81 = vmatpush1.msra.mxu0 %v48
    %82 = vmatprep.subr.mxu0 %v51
    %83 = vmatpush1.msra.mxu0 %v50
    %84 = vmatprep.subr.mxu0 %v53
    %85 = vmatpush1.msra.mxu0 %v52
    %86 = vmatprep.subr.mxu0 %v55
    %87 = vmatpush1.msra.mxu0 %v54
    %88 = vmatprep.subr.mxu0 %v57
    %89 = vmatpush1.msra.mxu0 %v56
    %90 = vmatprep.subr.mxu0 %v59
    %91 = vmatpush1.msra.mxu0 %v58
    %92 = vmatprep.subr.mxu0 %v61
    %93 = vmatpush1.msra.mxu0 %v60
    %94 = vmatprep.subr.mxu0 %v63
    %95 = vmatpush1.msra.mxu0 %v62
    %96 = vmatprep.subr.mxu0 0.0
    %97 = vmatpush1.msra.mxu0 0.0
    %98 = vmatprep.subr.mxu0 0.0
    %99 = vmatpush1.msra.mxu0 0.0
    %100 = vmatprep.subr.mxu0 0.0
    %101 = vmatpush1.msra.mxu0 0.0
    %102 = vmatprep.subr.mxu0 0.0
    %103 = vmatpush1.msra.mxu0 0.0
    %104 = vmatprep.subr.mxu0 0.0
    %105 = vmatpush1.msra.mxu0 0.0
    %106 = vmatprep.subr.mxu0 0.0
    %107 = vmatpush1.msra.mxu0 0.0
    %108 = vmatprep.subr.mxu0 0.0
    %109 = vmatpush1.msra.mxu0 0.0
    %110 = vmatprep.subr.mxu0 0.0
    %111 = vmatpush1.msra.mxu0 0.0
    %112 = vmatprep.subr.mxu0 0.0
    %113 = vmatpush1.msra.mxu0 0.0
    %114 = vmatprep.subr.mxu0 0.0
    %115 = vmatpush1.msra.mxu0 0.0
    %116 = vmatprep.subr.mxu0 0.0
    %117 = vmatpush1.msra.mxu0 0.0
    %118 = vmatprep.subr.mxu0 0.0
    %119 = vmatpush1.msra.mxu0 0.0
    %120 = vmatprep.subr.mxu0 0.0
    %121 = vmatpush1.msra.mxu0 0.0
    %122 = vmatprep.subr.mxu0 0.0
    %123 = vmatpush1.msra.mxu0 0.0
    %124 = vmatprep.subr.mxu0 0.0
    %125 = vmatpush1.msra.mxu0 0.0
    %126 = vmatprep.subr.mxu0 0.0
    %127 = vmatpush1.msra.mxu0 0.0
    %128 = vmatprep.subr.mxu0 0.0
    %129 = vmatpush1.msra.mxu0 0.0
    %130 = vmatprep.subr.mxu0 0.0
    %131 = vmatpush1.msra.mxu0 0.0
    %132 = vmatprep.subr.mxu0 0.0
    %133 = vmatpush1.msra.mxu0 0.0
    %134 = vmatprep.subr.mxu0 0.0
    %135 = vmatpush1.msra.mxu0 0.0
    %136 = vmatprep.subr.mxu0 0.0
    %137 = vmatpush1.msra.mxu0 0.0
    %138 = vmatprep.subr.mxu0 0.0
    %139 = vmatpush1.msra.mxu0 0.0
    %140 = vmatprep.subr.mxu0 0.0
    %141 = vmatpush1.msra.mxu0 0.0
    %142 = vmatprep.subr.mxu0 0.0
    %143 = vmatpush1.msra.mxu0 0.0
    %144 = vmatprep.mubr.f32.mxu0 0.0
    %145 = vmatmul.mubr.f32.gmra.mrb[0].mxu0 %v66
    %v146 = vpop.f32.mrb[0].mxu0
    %v147 = vadd.f32 0.0, %v146
    %v148 = vpop.f32.mrb[0].mxu0
    %v149 = vadd.f32 0.0, %v148
    %150 = vmatprep.mubr.f32.mxu0 0.0
    %151 = vmatmul.mubr.f32.gmra.mrb[0].mxu0 %v69
    %v152 = vpop.f32.mrb[0].mxu0
    %v153 = vadd.f32 0.0, %v152
    %v154 = vpop.f32.mrb[0].mxu0
    %v155 = vadd.f32 0.0, %v154
    %156 = vmatprep.mubr.f32.mxu0 0.0
    %157 = vmatmul.mubr.f32.gmra.mrb[0].mxu0 %v72
    %v158 = vpop.f32.mrb[0].mxu0
    %v159 = vadd.f32 0.0, %v158
    %v160 = vpop.f32.mrb[0].mxu0
    %v161 = vadd.f32 0.0, %v160
    %162 = vmatprep.mubr.f32.mxu0 0.0
    %163 = vmatmul.mubr.f32.gmra.mrb[0].mxu0 %v75
    %v164 = vpop.f32.mrb[0].mxu0
    %v165 = vadd.f32 0.0, %v164
    %v166 = vpop.f32.mrb[0].mxu0
    %v167 = vadd.f32 0.0, %v166
    %168 = vmatprep.mubr.f32.mxu0 0.0
    %169 = vmatmul.mubr.f32.gmra.mrb[0].mxu0 %v78
    %v170 = vpop.f32.mrb[0].mxu0
    %v171 = vadd.f32 0.0, %v170
    %v172 = vpop.f32.mrb[0].mxu0
    %v173 = vadd.f32 0.0, %v172
    %174 = vdwg.mxu0
    %v175 = vmul.f32 %v147, %v147
    %v176 = vmul.f32 %v153, %v153
    %v177 = vmul.f32 %v159, %v159
    %v178 = vmul.f32 %v165, %v165
    %v179 = vmul.f32 %v171, %v171
    %v180 = vmul.f32 %v149, %v149
    %v181 = vmul.f32 %v155, %v155
    %v182 = vmul.f32 %v161, %v161
    %v183 = vmul.f32 %v167, %v167
    %v184 = vmul.f32 %v173, %v173
    %v185 = vadd.f32 %v175, %v180
    %v186 = vadd.f32 %v176, %v181
    %v187 = vadd.f32 %v177, %v182
    %v188 = vadd.f32 %v178, %v183
    %v189 = vadd.f32 %v179, %v184
    %v190 = vmax.f32 %v185, 1e-07
    %v191 = vmax.f32 %v186, 1e-07
    %v192 = vmax.f32 %v187, 1e-07
    %v193 = vmax.f32 %v188, 1e-07
    %v194 = vmax.f32 %v189, 1e-07
    %v195 = vrsqrt.pop %v190
    %v196 = vmul.f32 %v190, %v195
    %vm197 = vcmp.eq.f32.partialorder %v190, inf
    %v198 = vsel %vm197, %v190, %v196
    %vm199 = vcmp.eq.f32.partialorder %v190, 0.0
    %v200 = vand.u32 %v190, 2147483648
    %v201 = vsel %vm199, %v200, %v198
    %v202 = vrsqrt.pop %v191
    %v203 = vmul.f32 %v191, %v202
    %vm204 = vcmp.eq.f32.partialorder %v191, inf
    %v205 = vsel %vm204, %v191, %v203
    %vm206 = vcmp.eq.f32.partialorder %v191, 0.0
    %v207 = vand.u32 %v191, 2147483648
    %v208 = vsel %vm206, %v207, %v205
    %v209 = vrsqrt.pop %v192
    %v210 = vmul.f32 %v192, %v209
    %vm211 = vcmp.eq.f32.partialorder %v192, inf
    %v212 = vsel %vm211, %v192, %v210
    %vm213 = vcmp.eq.f32.partialorder %v192, 0.0
    %v214 = vand.u32 %v192, 2147483648
    %v215 = vsel %vm213, %v214, %v212
    %v216 = vrsqrt.pop %v193
    %v217 = vmul.f32 %v193, %v216
    %vm218 = vcmp.eq.f32.partialorder %v193, inf
    %v219 = vsel %vm218, %v193, %v217
    %vm220 = vcmp.eq.f32.partialorder %v193, 0.0
    %v221 = vand.u32 %v193, 2147483648
    %v222 = vsel %vm220, %v221, %v219
    %v223 = vrsqrt.pop %v194
    %v224 = vmul.f32 %v194, %v223
    %vm225 = vcmp.eq.f32.partialorder %v194, inf
    %v226 = vsel %vm225, %v194, %v224
    %vm227 = vcmp.eq.f32.partialorder %v194, 0.0
    %v228 = vand.u32 %v194, 2147483648
    %v229 = vsel %vm227, %v228, %v226
    %230 = vst [vmem:[#allocation7] sm:$0xff] %v201
    %231 = vst [vmem:[#allocation7 + $0x8] sm:$0xff] %v208
    %232 = vst [vmem:[#allocation7 + $0x10] sm:$0xff] %v215
    %233 = vst [vmem:[#allocation7 + $0x18] sm:$0xff] %v222
    %234 = vst [vmem:[#allocation7 + $0x20] sm:$0xff] %v229
    %v235 = vand.u32 2147483647, %v147
    %v236 = vand.u32 2147483647, %v153
    %v237 = vand.u32 2147483647, %v159
    %v238 = vand.u32 2147483647, %v165
    %v239 = vand.u32 2147483647, %v171
    %v240 = vand.u32 2147483647, %v149
    %v241 = vand.u32 2147483647, %v155
    %v242 = vand.u32 2147483647, %v161
    %v243 = vand.u32 2147483647, %v167
    %v244 = vand.u32 2147483647, %v173
    %v245 = vmax.f32 %v235, %v240
    %v246 = vmax.f32 %v236, %v241
    %v247 = vmax.f32 %v237, %v242
    %v248 = vmax.f32 %v238, %v243
    %v249 = vmax.f32 %v239, %v244
    %v250 = vmin.f32 %v235, %v240
    %v251 = vmin.f32 %v236, %v241
    %v252 = vmin.f32 %v237, %v242
    %v253 = vmin.f32 %v238, %v243
    %v254 = vmin.f32 %v239, %v244
    %vm255 = vcmp.eq.f32.partialorder %v245, 0.0
    %vm256 = vcmp.eq.f32.partialorder %v246, 0.0
    %vm257 = vcmp.eq.f32.partialorder %v247, 0.0
    %vm258 = vcmp.eq.f32.partialorder %v248, 0.0
    %vm259 = vcmp.eq.f32.partialorder %v249, 0.0
    %v260 = vsel %vm255, 1.0, %v245
    %v261 = vsel %vm256, 1.0, %v246
    %v262 = vsel %vm257, 1.0, %v247
    %v263 = vsel %vm258, 1.0, %v248
    %v264 = vsel %vm259, 1.0, %v249
    %v265 = vrcp.pop %v260
    %v266 = vrcp.pop %v261
    %v267 = vrcp.pop %v262
    %v268 = vrcp.pop %v263
    %v269 = vrcp.pop %v264
    %v270 = vmul.f32 %v250, %v265
    %v271 = vmul.f32 %v251, %v266
    %v272 = vmul.f32 %v252, %v267
    %v273 = vmul.f32 %v253, %v268
    %v274 = vmul.f32 %v254, %v269
    %v275 = vmul.f32 %v270, %v270
    %v276 = vmul.f32 %v271, %v271
    %v277 = vmul.f32 %v272, %v272
    %v278 = vmul.f32 %v273, %v273
    %v279 = vmul.f32 %v274, %v274
    %v280 = vmul.f32 %v275, 0.0028662258
    %v281 = vmul.f32 %v276, 0.0028662258
    %v282 = vmul.f32 %v277, 0.0028662258
    %v283 = vmul.f32 %v278, 0.0028662258
    %v284 = vmul.f32 %v279, 0.0028662258
    %v285 = vadd.f32 %v280, -0.016165737
    %v286 = vadd.f32 %v281, -0.016165737
    %v287 = vadd.f32 %v282, -0.016165737
    %v288 = vadd.f32 %v283, -0.016165737
    %v289 = vadd.f32 %v284, -0.016165737
    %v290 = vmul.f32 %v285, %v275
    %v291 = vmul.f32 %v286, %v276
    %v292 = vmul.f32 %v287, %v277
    %v293 = vmul.f32 %v288, %v278
    %v294 = vmul.f32 %v289, %v279
    %v295 = vadd.f32 %v290, 0.042909615
    %v296 = vadd.f32 %v291, 0.042909615
    %v297 = vadd.f32 %v292, 0.042909615
    %v298 = vadd.f32 %v293, 0.042909615
    %v299 = vadd.f32 %v294, 0.042909615
    %v300 = vmul.f32 %v295, %v275
    %v301 = vmul.f32 %v296, %v276
    %v302 = vmul.f32 %v297, %v277
    %v303 = vmul.f32 %v298, %v278
    %v304 = vmul.f32 %v299, %v279
    %v305 = vadd.f32 %v300, -0.07528964
    %v306 = vadd.f32 %v301, -0.07528964
    %v307 = vadd.f32 %v302, -0.07528964
    %v308 = vadd.f32 %v303, -0.07528964
    %v309 = vadd.f32 %v304, -0.07528964
    %v310 = vmul.f32 %v305, %v275
    %v311 = vmul.f32 %v306, %v276
    %v312 = vmul.f32 %v307, %v277
    %v313 = vmul.f32 %v308, %v278
    %v314 = vmul.f32 %v309, %v279
    %v315 = vadd.f32 %v310, 0.10656264
    %v316 = vadd.f32 %v311, 0.10656264
    %v317 = vadd.f32 %v312, 0.10656264
    %v318 = vadd.f32 %v313, 0.10656264
    %v319 = vadd.f32 %v314, 0.10656264
    %v320 = vmul.f32 %v315, %v275
    %v321 = vmul.f32 %v316, %v276
    %v322 = vmul.f32 %v317, %v277
    %v323 = vmul.f32 %v318, %v278
    %v324 = vmul.f32 %v319, %v279
    %v325 = vadd.f32 %v320, -0.142089
    %v326 = vadd.f32 %v321, -0.142089
    %v327 = vadd.f32 %v322, -0.142089
    %v328 = vadd.f32 %v323, -0.142089
    %v329 = vadd.f32 %v324, -0.142089
    %v330 = vmul.f32 %v325, %v275
    %v331 = vmul.f32 %v326, %v276
    %v332 = vmul.f32 %v327, %v277
    %v333 = vmul.f32 %v328, %v278
    %v334 = vmul.f32 %v329, %v279
    %v335 = vadd.f32 %v330, 0.19993551
    %v336 = vadd.f32 %v331, 0.19993551
    %v337 = vadd.f32 %v332, 0.19993551
    %v338 = vadd.f32 %v333, 0.19993551
    %v339 = vadd.f32 %v334, 0.19993551
    %v340 = vmul.f32 %v335, %v275
    %v341 = vmul.f32 %v336, %v276
    %v342 = vmul.f32 %v337, %v277
    %v343 = vmul.f32 %v338, %v278
    %v344 = vmul.f32 %v339, %v279
    %v345 = vadd.f32 %v340, -0.33333147
    %v346 = vadd.f32 %v341, -0.33333147
    %v347 = vadd.f32 %v342, -0.33333147
    %v348 = vadd.f32 %v343, -0.33333147
    %v349 = vadd.f32 %v344, -0.33333147
    %v350 = vmul.f32 %v270, %v275
    %v351 = vmul.f32 %v271, %v276
    %v352 = vmul.f32 %v272, %v277
    %v353 = vmul.f32 %v273, %v278
    %v354 = vmul.f32 %v274, %v279
    %v355 = vmul.f32 %v350, %v345
    %v356 = vmul.f32 %v351, %v346
    %v357 = vmul.f32 %v352, %v347
    %v358 = vmul.f32 %v353, %v348
    %v359 = vmul.f32 %v354, %v349
    %v360 = vadd.f32 %v270, %v355
    %v361 = vadd.f32 %v271, %v356
    %v362 = vadd.f32 %v272, %v357
    %v363 = vadd.f32 %v273, %v358
    %v364 = vadd.f32 %v274, %v359
    %vm365 = vcmp.gt.f32.partialorder %v240, %v235
    %vm366 = vcmp.gt.f32.partialorder %v241, %v236
    %vm367 = vcmp.gt.f32.partialorder %v242, %v237
    %vm368 = vcmp.gt.f32.partialorder %v243, %v238
    %vm369 = vcmp.gt.f32.partialorder %v244, %v239
    %v370 = vsub.f32 1.5707964, %v360
    %v371 = vsub.f32 1.5707964, %v361
    %v372 = vsub.f32 1.5707964, %v362
    %v373 = vsub.f32 1.5707964, %v363
    %v374 = vsub.f32 1.5707964, %v364
    %v375 = vsel %vm365, %v370, %v360
    %v376 = vsel %vm366, %v371, %v361
    %v377 = vsel %vm367, %v372, %v362
    %v378 = vsel %vm368, %v373, %v363
    %v379 = vsel %vm369, %v374, %v364
    %vm380 = vcmp.lt.f32.partialorder %v147, 0.0
    %vm381 = vcmp.lt.f32.partialorder %v153, 0.0
    %vm382 = vcmp.lt.f32.partialorder %v159, 0.0
    %vm383 = vcmp.lt.f32.partialorder %v165, 0.0
    %vm384 = vcmp.lt.f32.partialorder %v171, 0.0
    %v385 = vsub.f32 3.1415927, %v375
    %v386 = vsub.f32 3.1415927, %v376
    %v387 = vsub.f32 3.1415927, %v377
    %v388 = vsub.f32 3.1415927, %v378
    %v389 = vsub.f32 3.1415927, %v379
    %v390 = vsel %vm380, %v385, %v375
    %v391 = vsel %vm381, %v386, %v376
    %v392 = vsel %vm382, %v387, %v377
    %v393 = vsel %vm383, %v388, %v378
    %v394 = vsel %vm384, %v389, %v379
    %vm395 = vcmp.lt.f32.partialorder %v149, 0.0
    %vm396 = vcmp.lt.f32.partialorder %v155, 0.0
    %vm397 = vcmp.lt.f32.partialorder %v161, 0.0
    %vm398 = vcmp.lt.f32.partialorder %v167, 0.0
    %vm399 = vcmp.lt.f32.partialorder %v173, 0.0
    %v400 = vsub.f32 0.0, %v390
    %v401 = vsub.f32 0.0, %v391
    %v402 = vsub.f32 0.0, %v392
    %v403 = vsub.f32 0.0, %v393
    %v404 = vsub.f32 0.0, %v394
    %v405 = vsel %vm395, %v400, %v390
    %v406 = vsel %vm396, %v401, %v391
    %v407 = vsel %vm397, %v402, %v392
    %v408 = vsel %vm398, %v403, %v393
    %v409 = vsel %vm399, %v404, %v394
    %v410 = vsel %vm255, 0.0, %v405
    %v411 = vsel %vm256, 0.0, %v406
    %v412 = vsel %vm257, 0.0, %v407
    %v413 = vsel %vm258, 0.0, %v408
    %v414 = vsel %vm259, 0.0, %v409
    %415 = vst [vmem:[#allocation8] sm:$0xff] %v410
    %416 = vst [vmem:[#allocation8 + $0x8] sm:$0xff] %v411
    %417 = vst [vmem:[#allocation8 + $0x10] sm:$0xff] %v412
    %418 = vst [vmem:[#allocation8 + $0x18] sm:$0xff] %v413
    %419 = vst [vmem:[#allocation8 + $0x20] sm:$0xff] %v414
    // Predicated region
    $region18: #{tpu_custom_call.1} parent=1 // pred_check
      _
    $region19: #{tpu_custom_call.1} parent=1 // pred_check_branch
      %421 = sbr.rel (0) target = $region21
    $region20: #{tpu_custom_call.1} parent=1 // pred_region
      %s423 = ssub.s32 640, 640
      %424 = vsyncadd [#allocation4], %s423
      %s425 = sshll.u32 [#allocation7], 4
      %s426 = int_to_ptr.vmem [resolvable:$true] %s425
      %431 = dma.vmem_to_hbm [thread:$0]  %s426, 640, %s2, [#allocation4], 128, 128, 8
    $region21: #{tpu_custom_call.1} parent=1 // pred_fallthru
      _
    // Predicated region
    $region22: #{tpu_custom_call.1} parent=1 // pred_check
      _
    $region23: #{tpu_custom_call.1} parent=1 // pred_check_branch
      %433 = sbr.rel (0) target = $region25
    $region24: #{tpu_custom_call.1} parent=1 // pred_region
      %s435 = ssub.s32 640, 640
      %436 = vsyncadd [#allocation9], %s435
      %s437 = sshll.u32 [#allocation8], 4
      %s438 = int_to_ptr.vmem [resolvable:$true] %s437
      %443 = dma.vmem_to_hbm [thread:$0]  %s438, 640, %s3, [#allocation9], 128, 128, 8
    $region25: #{tpu_custom_call.1} parent=1 // pred_fallthru
      _
    // Predicated region
    $region26: #{tpu_custom_call.1} parent=1 // pred_check
      _
    $region27: #{tpu_custom_call.1} parent=1 // pred_check_branch
      %445 = sbr.rel (0) target = $region29
    $region28: #{tpu_custom_call.1} parent=1 // pred_region
      %446 = dma.done [#allocation4], 640
    $region29: #{tpu_custom_call.1} parent=1 // pred_fallthru
      _
    // Predicated region
    $region30: #{tpu_custom_call.1} parent=1 // pred_check
      _
    $region31: #{tpu_custom_call.1} parent=1 // pred_check_branch
      %448 = sbr.rel (0) target = $region33
    $region32: #{tpu_custom_call.1} parent=1 // pred_region
      %449 = dma.done [#allocation9], 640
    $region33: #{tpu_custom_call.1} parent=1 // pred_fallthru
      _
    %450 = vsyncpa [#allocation3], 1
    %451 = vsyncpa [#allocation6], 1
    %452 = vsyncpa [#allocation4], 1
    %453 = vsyncpa [#allocation9], 1

</llo_original>
